<compile_context>
chip_gen: v7x
topology: tpu7x:2x2x1
jax: 0.10.0
libtpu: 0.0.40
codegen_flags: <defaults>
</compile_context>

<pallas_src>
import functools

import jax
import jax.numpy as jnp
from jax.experimental import pallas as pl
from jax.experimental.pallas import tpu as pltpu


def _shift_l2_kernel(pred_ref, lab_ref, out_ref, *,
                     TB, H, W, B, radius, ignore_value, has_tail):
    """One (TB, H, W) batch block: min-over-shifts L2 -> packed (total, count)."""
    INF = jnp.float32(jnp.inf)

    # Cast after load so HBM traffic stays in the source dtype.
    pred = pred_ref[...].astype(jnp.float32)          # (TB, H, W)
    lab_raw = lab_ref[...]
    lab = lab_raw.astype(jnp.float32)                 # (TB, H, W)

    # Fold the ignore test into the label ONCE (compare in the source dtype so
    # integer ignore markers are matched exactly).
    if ignore_value is not None:
        ign = jnp.asarray(ignore_value, dtype=lab_raw.dtype)
        lab = jnp.where(lab_raw == ign, INF, lab)

    # Batch-tail mask (only emitted when TB does not divide B): out-of-bounds
    # batch rows get label=inf / pred=0 so they contribute nothing.
    if has_tail:
        b0 = pl.program_id(0) * TB
        bi = jax.lax.broadcasted_iota(jnp.int32, (TB, 1, 1), 0)
        in_b = (b0 + bi) < B                          # (TB, 1, 1)
        lab = jnp.where(in_b, lab, INF)
        pred = jnp.where(in_b, pred, jnp.float32(0.0))

    # Tiny index planes for wrap masks: depend only on the sublane / lane axis.
    ri = jax.lax.broadcasted_iota(jnp.int32, (1, H, 1), 1)   # row index
    ci = jax.lax.broadcasted_iota(jnp.int32, (1, 1, W), 2)   # col index

    best = jnp.full((TB, H, W), INF, dtype=jnp.float32)

    # Static unroll over the (2*radius+1)^2 shifts (radius is small & static).
    # shifted[i] = lab[i + s]  ->  roll by -s (jnp.roll semantics).
    for s in range(-radius, radius + 1):
        if s == 0:
            lab_row = lab
        else:
            lab_row = pltpu.roll(lab, shift=(-s) % H, axis=1)
            row_wrapped = (ri >= (H - s)) if s > 0 else (ri < (-s))
            lab_row = jnp.where(row_wrapped, INF, lab_row)    # 1 select per s
        for t in range(-radius, radius + 1):
            if t == 0:
                lab_st = lab_row
            else:
                lab_st = pltpu.roll(lab_row, shift=(-t) % W, axis=2)
                col_wrapped = (ci >= (W - t)) if t > 0 else (ci < (-t))
                lab_st = jnp.where(col_wrapped, INF, lab_st)  # 1 select per t
            d = lab_st - pred
            best = jnp.minimum(best, d * d)

    # Validity: at least one finite candidate (invalid shifts are inf).
    has_valid = best < INF
    total = jnp.sum(jnp.where(has_valid, best, jnp.float32(0.0)))
    count = jnp.sum(has_valid.astype(jnp.float32))   # exact: block < 2^24 elems

    # Pack both scalars into one lane-dense (1, 8, 128) block:
    # lane 0 = total, lane 1 = count, rest 0.
    lane = jax.lax.broadcasted_iota(jnp.int32, (1, 8, 128), 2)
    out_ref[...] = jnp.where(lane == 0, total,
                             jnp.where(lane == 1, count, jnp.float32(0.0)))


def shift_l2_loss(predictions, labels, *, ignore_value=None, min_measurements=5,
                  radius=1, batch_block=None, target_block_bytes=2 << 20):
    """predictions, labels: (N, C, H, W). Returns a scalar f32 loss."""
    N, C, H, W = predictions.shape
    B = N * C
    pred = predictions.reshape(B, H, W)   # keep source dtype; cast in-kernel
    lab = labels.reshape(B, H, W)

    # Block size: ~target_block_bytes of f32 per input block; cap at ceil(B/2)
    # so the "parallel" batch axis always yields >= 2 grid steps (v7x megacore).
    if batch_block is None:
        TB = max(1, int(target_block_bytes) // (H * W * 4))
    else:
        TB = max(1, int(batch_block))
    TB = min(TB, B)
    if B >= 2:
        TB = min(TB, -(-B // 2))          # ceil(B / 2)
    G = pl.cdiv(B, TB)
    has_tail = (B % TB) != 0

    kernel = functools.partial(
        _shift_l2_kernel, TB=TB, H=H, W=W, B=B, radius=radius,
        ignore_value=ignore_value, has_tail=has_tail)

    # Explicit VMEM budget: double-buffered inputs (2 arrays x 2 buffers) plus
    # ~10x the f32 block for live intermediates, clamped to stay well inside
    # v7x's 64 MiB physical VMEM (v5e/v6e have 128 MiB physical).
    in_itemsize = max(jnp.dtype(pred.dtype).itemsize, jnp.dtype(lab.dtype).itemsize)
    blk_in = TB * H * W * in_itemsize
    blk_f32 = TB * H * W * 4
    vmem_limit = int(min(32 << 20, max(16 << 20, 4 * blk_in + 10 * blk_f32 + (2 << 20))))

    partials = pl.pallas_call(
        kernel,
        grid=(G,),
        in_specs=[
            pl.BlockSpec((TB, H, W), lambda b: (b, 0, 0)),
            pl.BlockSpec((TB, H, W), lambda b: (b, 0, 0)),
        ],
        out_specs=pl.BlockSpec((1, 8, 128), lambda b: (b, 0, 0)),
        out_shape=jax.ShapeDtypeStruct((G, 8, 128), jnp.float32),
        compiler_params=pltpu.CompilerParams(
            dimension_semantics=("parallel",),
            vmem_limit_bytes=vmem_limit),
    )(pred, lab)

    total = jnp.sum(partials[:, 0, 0])
    # Per-block counts are exact integers in f32; reduce them exactly in int32.
    count_i = jnp.sum(partials[:, 0, 1].astype(jnp.int32))
    count = count_i.astype(jnp.float32)
    return jnp.where(count_i >= jnp.int32(min_measurements),
                     total / jnp.maximum(count, jnp.float32(1.0)),
                     jnp.float32(0.0))


def _reference(predictions, labels, *, ignore_value=None, min_measurements=5,
               radius=1):
    """Pure-JAX reference with identical semantics (for correctness check)."""
    N, C, H, W = predictions.shape
    pred = predictions.reshape(N * C, H, W).astype(jnp.float32)
    lab = labels.reshape(N * C, H, W).astype(jnp.float32)
    valid = jnp.ones_like(lab) if ignore_value is None else (
        lab != ignore_value).astype(jnp.float32)
    lab_p = jnp.pad(lab, ((0, 0), (radius, radius), (radius, radius)))
    val_p = jnp.pad(valid, ((0, 0), (radius, radius), (radius, radius)))
    best = jnp.full(pred.shape, jnp.inf)
    anyv = jnp.zeros(pred.shape)
    for dy in range(2 * radius + 1):
        for dx in range(2 * radius + 1):
            l = lab_p[:, dy:dy + H, dx:dx + W]
            v = val_p[:, dy:dy + H, dx:dx + W]
            d = jnp.where(v > 0, (l - pred) ** 2, jnp.inf)
            best = jnp.minimum(best, d)
            anyv = jnp.maximum(anyv, v)
    best = jnp.where(anyv > 0, best, 0.0)
    cnt = jnp.sum(anyv)
    return jnp.where(cnt >= float(min_measurements),
                     jnp.sum(best) / jnp.maximum(cnt, 1.0), 0.0)


if __name__ == "__main__":
    key = jax.random.PRNGKey(0)
    k1, k2, k3, k4, k5 = jax.random.split(key, 5)
    N, C, H, W = 2, 4, 16, 16
    predictions = jax.random.normal(k1, (N, C, H, W), dtype=jnp.float32)
    labels = jax.random.normal(k2, (N, C, H, W), dtype=jnp.float32)

    # Case 1: default config (no ignore_value), TB capped at ceil(B/2) -> G=2.
    loss = shift_l2_loss(predictions, labels, ignore_value=None,
                         min_measurements=5, radius=1)
    loss = jax.block_until_ready(loss)
    ref = _reference(predictions, labels, ignore_value=None,
                     min_measurements=5, radius=1)
    assert jnp.allclose(loss, ref, rtol=1e-5, atol=1e-5), (loss, ref)

    # Case 2: ignore_value sentinel folding + multi-block grid (batch_block=2).
    ignore = 7.0
    drop = jax.random.bernoulli(k3, 0.3, (N, C, H, W))
    labels2 = jnp.where(drop, jnp.float32(ignore), labels)
    loss2 = shift_l2_loss(predictions, labels2, ignore_value=ignore,
                          min_measurements=5, radius=1, batch_block=2)
    loss2 = jax.block_until_ready(loss2)
    ref2 = _reference(predictions, labels2, ignore_value=ignore,
                      min_measurements=5, radius=1)
    assert jnp.allclose(loss2, ref2, rtol=1e-5, atol=1e-5), (loss2, ref2)

    # Case 3: B=3 (odd) exercises the cdiv grid + in-kernel batch-tail mask.
    predictions3 = jax.random.normal(k4, (1, 3, H, W), dtype=jnp.float32)
    labels3 = jax.random.normal(k5, (1, 3, H, W), dtype=jnp.float32)
    loss3 = shift_l2_loss(predictions3, labels3, ignore_value=None,
                          min_measurements=5, radius=1)
    loss3 = jax.block_until_ready(loss3)
    ref3 = _reference(predictions3, labels3, ignore_value=None,
                      min_measurements=5, radius=1)
    assert jnp.allclose(loss3, ref3, rtol=1e-5, atol=1e-5), (loss3, ref3)

    print("KERNEL_OK")
</pallas_src>

<mosaic_0001>
module attributes {stable_mosaic.version = 11 : i64} {
  func.func @_shift_l2_kernel(%arg0: i32, %arg1: memref<4x16x16xf32, #tpu.memory_space<vmem>>, %arg2: memref<4x16x16xf32, #tpu.memory_space<vmem>>, %arg3: memref<1x8x128xf32, #tpu.memory_space<vmem>>) attributes {dimension_semantics = [#tpu.dimension_semantics<parallel>], iteration_bounds = array<i64: 2>, scalar_prefetch = 0 : i64, scratch_operands = 0 : i64, tpu.core_type = #tpu.core_type<tc>, window_params = [{transform_indices = @transform_0, window_bounds = array<i64: 4, 16, 16>}, {transform_indices = @transform_1, window_bounds = array<i64: 4, 16, 16>}, {transform_indices = @transform_2, window_bounds = array<i64: 1, 8, 128>}]} {
    %c0 = arith.constant 0 : index
    %c0_0 = arith.constant 0 : index
    %c0_1 = arith.constant 0 : index
    %0 = vector.load %arg1[%c0, %c0_0, %c0_1] : memref<4x16x16xf32, #tpu.memory_space<vmem>>, vector<4x16x16xf32>
    %c0_2 = arith.constant 0 : index
    %c0_3 = arith.constant 0 : index
    %c0_4 = arith.constant 0 : index
    %1 = vector.load %arg2[%c0_2, %c0_3, %c0_4] : memref<4x16x16xf32, #tpu.memory_space<vmem>>, vector<4x16x16xf32>
    %2 = tpu.iota {dimensions = array<i32: 1>} : vector<1x16x1xi32>
    %3 = tpu.iota {dimensions = array<i32: 2>} : vector<1x1x16xi32>
    %cst = arith.constant 0x7F800000 : f32
    %4 = vector.broadcast %cst : f32 to vector<4x16x16xf32>
    %c1_i32 = arith.constant 1 : i32
    %5 = tpu.dynamic_rotate %1 by %c1_i32 dim 1 : vector<4x16x16xf32>, i32 -> vector<4x16x16xf32>
    %c1_i32_5 = arith.constant 1 : i32
    %6 = vector.broadcast %c1_i32_5 : i32 to vector<1x16x1xi32>
    %7 = arith.cmpi slt, %2, %6 : vector<1x16x1xi32>
    %cst_6 = arith.constant 0x7F800000 : f32
    %8 = vector.shape_cast %7 : vector<1x16x1xi1> to vector<1x16x1xi1>
    %9 = vector.broadcast %8 : vector<1x16x1xi1> to vector<4x16x16xi1>
    %10 = vector.broadcast %cst_6 : f32 to vector<4x16x16xf32>
    %11 = arith.select %9, %10, %5 : vector<4x16x16xi1>, vector<4x16x16xf32>
    %c1_i32_7 = arith.constant 1 : i32
    %12 = tpu.dynamic_rotate %11 by %c1_i32_7 dim 2 : vector<4x16x16xf32>, i32 -> vector<4x16x16xf32>
    %c1_i32_8 = arith.constant 1 : i32
    %13 = vector.broadcast %c1_i32_8 : i32 to vector<1x1x16xi32>
    %14 = arith.cmpi slt, %3, %13 : vector<1x1x16xi32>
    %cst_9 = arith.constant 0x7F800000 : f32
    %15 = vector.shape_cast %14 : vector<1x1x16xi1> to vector<1x1x16xi1>
    %16 = vector.broadcast %15 : vector<1x1x16xi1> to vector<4x16x16xi1>
    %17 = vector.broadcast %cst_9 : f32 to vector<4x16x16xf32>
    %18 = arith.select %16, %17, %12 : vector<4x16x16xi1>, vector<4x16x16xf32>
    %19 = arith.subf %18, %0 : vector<4x16x16xf32>
    %20 = arith.mulf %19, %19 : vector<4x16x16xf32>
    %21 = arith.minimumf %4, %20 : vector<4x16x16xf32>
    %22 = arith.subf %11, %0 : vector<4x16x16xf32>
    %23 = arith.mulf %22, %22 : vector<4x16x16xf32>
    %24 = arith.minimumf %21, %23 : vector<4x16x16xf32>
    %c15_i32 = arith.constant 15 : i32
    %25 = tpu.dynamic_rotate %11 by %c15_i32 dim 2 : vector<4x16x16xf32>, i32 -> vector<4x16x16xf32>
    %c15_i32_10 = arith.constant 15 : i32
    %26 = vector.broadcast %c15_i32_10 : i32 to vector<1x1x16xi32>
    %27 = arith.cmpi sge, %3, %26 : vector<1x1x16xi32>
    %cst_11 = arith.constant 0x7F800000 : f32
    %28 = vector.shape_cast %27 : vector<1x1x16xi1> to vector<1x1x16xi1>
    %29 = vector.broadcast %28 : vector<1x1x16xi1> to vector<4x16x16xi1>
    %30 = vector.broadcast %cst_11 : f32 to vector<4x16x16xf32>
    %31 = arith.select %29, %30, %25 : vector<4x16x16xi1>, vector<4x16x16xf32>
    %32 = arith.subf %31, %0 : vector<4x16x16xf32>
    %33 = arith.mulf %32, %32 : vector<4x16x16xf32>
    %34 = arith.minimumf %24, %33 : vector<4x16x16xf32>
    %c1_i32_12 = arith.constant 1 : i32
    %35 = tpu.dynamic_rotate %1 by %c1_i32_12 dim 2 : vector<4x16x16xf32>, i32 -> vector<4x16x16xf32>
    %c1_i32_13 = arith.constant 1 : i32
    %36 = vector.broadcast %c1_i32_13 : i32 to vector<1x1x16xi32>
    %37 = arith.cmpi slt, %3, %36 : vector<1x1x16xi32>
    %cst_14 = arith.constant 0x7F800000 : f32
    %38 = vector.shape_cast %37 : vector<1x1x16xi1> to vector<1x1x16xi1>
    %39 = vector.broadcast %38 : vector<1x1x16xi1> to vector<4x16x16xi1>
    %40 = vector.broadcast %cst_14 : f32 to vector<4x16x16xf32>
    %41 = arith.select %39, %40, %35 : vector<4x16x16xi1>, vector<4x16x16xf32>
    %42 = arith.subf %41, %0 : vector<4x16x16xf32>
    %43 = arith.mulf %42, %42 : vector<4x16x16xf32>
    %44 = arith.minimumf %34, %43 : vector<4x16x16xf32>
    %45 = arith.subf %1, %0 : vector<4x16x16xf32>
    %46 = arith.mulf %45, %45 : vector<4x16x16xf32>
    %47 = arith.minimumf %44, %46 : vector<4x16x16xf32>
    %c15_i32_15 = arith.constant 15 : i32
    %48 = tpu.dynamic_rotate %1 by %c15_i32_15 dim 2 : vector<4x16x16xf32>, i32 -> vector<4x16x16xf32>
    %c15_i32_16 = arith.constant 15 : i32
    %49 = vector.broadcast %c15_i32_16 : i32 to vector<1x1x16xi32>
    %50 = arith.cmpi sge, %3, %49 : vector<1x1x16xi32>
    %cst_17 = arith.constant 0x7F800000 : f32
    %51 = vector.shape_cast %50 : vector<1x1x16xi1> to vector<1x1x16xi1>
    %52 = vector.broadcast %51 : vector<1x1x16xi1> to vector<4x16x16xi1>
    %53 = vector.broadcast %cst_17 : f32 to vector<4x16x16xf32>
    %54 = arith.select %52, %53, %48 : vector<4x16x16xi1>, vector<4x16x16xf32>
    %55 = arith.subf %54, %0 : vector<4x16x16xf32>
    %56 = arith.mulf %55, %55 : vector<4x16x16xf32>
    %57 = arith.minimumf %47, %56 : vector<4x16x16xf32>
    %c15_i32_18 = arith.constant 15 : i32
    %58 = tpu.dynamic_rotate %1 by %c15_i32_18 dim 1 : vector<4x16x16xf32>, i32 -> vector<4x16x16xf32>
    %c15_i32_19 = arith.constant 15 : i32
    %59 = vector.broadcast %c15_i32_19 : i32 to vector<1x16x1xi32>
    %60 = arith.cmpi sge, %2, %59 : vector<1x16x1xi32>
    %cst_20 = arith.constant 0x7F800000 : f32
    %61 = vector.shape_cast %60 : vector<1x16x1xi1> to vector<1x16x1xi1>
    %62 = vector.broadcast %61 : vector<1x16x1xi1> to vector<4x16x16xi1>
    %63 = vector.broadcast %cst_20 : f32 to vector<4x16x16xf32>
    %64 = arith.select %62, %63, %58 : vector<4x16x16xi1>, vector<4x16x16xf32>
    %c1_i32_21 = arith.constant 1 : i32
    %65 = tpu.dynamic_rotate %64 by %c1_i32_21 dim 2 : vector<4x16x16xf32>, i32 -> vector<4x16x16xf32>
    %c1_i32_22 = arith.constant 1 : i32
    %66 = vector.broadcast %c1_i32_22 : i32 to vector<1x1x16xi32>
    %67 = arith.cmpi slt, %3, %66 : vector<1x1x16xi32>
    %cst_23 = arith.constant 0x7F800000 : f32
    %68 = vector.shape_cast %67 : vector<1x1x16xi1> to vector<1x1x16xi1>
    %69 = vector.broadcast %68 : vector<1x1x16xi1> to vector<4x16x16xi1>
    %70 = vector.broadcast %cst_23 : f32 to vector<4x16x16xf32>
    %71 = arith.select %69, %70, %65 : vector<4x16x16xi1>, vector<4x16x16xf32>
    %72 = arith.subf %71, %0 : vector<4x16x16xf32>
    %73 = arith.mulf %72, %72 : vector<4x16x16xf32>
    %74 = arith.minimumf %57, %73 : vector<4x16x16xf32>
    %75 = arith.subf %64, %0 : vector<4x16x16xf32>
    %76 = arith.mulf %75, %75 : vector<4x16x16xf32>
    %77 = arith.minimumf %74, %76 : vector<4x16x16xf32>
    %c15_i32_24 = arith.constant 15 : i32
    %78 = tpu.dynamic_rotate %64 by %c15_i32_24 dim 2 : vector<4x16x16xf32>, i32 -> vector<4x16x16xf32>
    %c15_i32_25 = arith.constant 15 : i32
    %79 = vector.broadcast %c15_i32_25 : i32 to vector<1x1x16xi32>
    %80 = arith.cmpi sge, %3, %79 : vector<1x1x16xi32>
    %cst_26 = arith.constant 0x7F800000 : f32
    %81 = vector.shape_cast %80 : vector<1x1x16xi1> to vector<1x1x16xi1>
    %82 = vector.broadcast %81 : vector<1x1x16xi1> to vector<4x16x16xi1>
    %83 = vector.broadcast %cst_26 : f32 to vector<4x16x16xf32>
    %84 = arith.select %82, %83, %78 : vector<4x16x16xi1>, vector<4x16x16xf32>
    %85 = arith.subf %84, %0 : vector<4x16x16xf32>
    %86 = arith.mulf %85, %85 : vector<4x16x16xf32>
    %87 = arith.minimumf %77, %86 : vector<4x16x16xf32>
    %cst_27 = arith.constant 0x7F800000 : f32
    %88 = vector.broadcast %cst_27 : f32 to vector<4x16x16xf32>
    %89 = arith.cmpf olt, %87, %88 : vector<4x16x16xf32>
    %cst_28 = arith.constant 0.000000e+00 : f32
    %90 = vector.broadcast %cst_28 : f32 to vector<4x16x16xf32>
    %91 = arith.select %89, %87, %90 : vector<4x16x16xi1>, vector<4x16x16xf32>
    %92 = vector.shape_cast %91 : vector<4x16x16xf32> to vector<1x4x16x16xf32>
    %cst_29 = arith.constant dense<0.000000e+00> : vector<1xf32>
    %93 = vector.multi_reduction <add>, %92, %cst_29 [1, 2, 3] : vector<1x4x16x16xf32> to vector<1xf32>
    %94 = vector.shape_cast %93 : vector<1xf32> to vector<1x1x1x1xf32>
    %95 = vector.extract %94[0, 0, 0, 0] : f32 from vector<1x1x1x1xf32>
    %96 = arith.extui %89 : vector<4x16x16xi1> to vector<4x16x16xi32>
    %97 = arith.sitofp %96 : vector<4x16x16xi32> to vector<4x16x16xf32>
    %98 = vector.shape_cast %97 : vector<4x16x16xf32> to vector<1x4x16x16xf32>
    %cst_30 = arith.constant dense<0.000000e+00> : vector<1xf32>
    %99 = vector.multi_reduction <add>, %98, %cst_30 [1, 2, 3] : vector<1x4x16x16xf32> to vector<1xf32>
    %100 = vector.shape_cast %99 : vector<1xf32> to vector<1x1x1x1xf32>
    %101 = vector.extract %100[0, 0, 0, 0] : f32 from vector<1x1x1x1xf32>
    %102 = tpu.iota {dimensions = array<i32: 2>} : vector<1x8x128xi32>
    %c0_i32 = arith.constant 0 : i32
    %103 = vector.broadcast %c0_i32 : i32 to vector<1x8x128xi32>
    %104 = arith.cmpi eq, %102, %103 : vector<1x8x128xi32>
    %c1_i32_31 = arith.constant 1 : i32
    %105 = vector.broadcast %c1_i32_31 : i32 to vector<1x8x128xi32>
    %106 = arith.cmpi eq, %102, %105 : vector<1x8x128xi32>
    %cst_32 = arith.constant 0.000000e+00 : f32
    %107 = vector.broadcast %101 : f32 to vector<1x8x128xf32>
    %108 = vector.broadcast %cst_32 : f32 to vector<1x8x128xf32>
    %109 = arith.select %106, %107, %108 : vector<1x8x128xi1>, vector<1x8x128xf32>
    %110 = vector.broadcast %95 : f32 to vector<1x8x128xf32>
    %111 = arith.select %104, %110, %109 : vector<1x8x128xi1>, vector<1x8x128xf32>
    %c0_33 = arith.constant 0 : index
    %c0_34 = arith.constant 0 : index
    %c0_35 = arith.constant 0 : index
    %112 = vector.load %arg3[%c0_33, %c0_34, %c0_35] : memref<1x8x128xf32, #tpu.memory_space<vmem>>, vector<1x8x128xf32>
    tpu.vector_store %arg3[%c0_33, %c0_34, %c0_35], %111 {strides = array<i32>} : memref<1x8x128xf32, #tpu.memory_space<vmem>>, vector<1x8x128xf32>,
    return
  }
  func.func @transform_0(%arg0: i32) -> (i32, i32, i32) {
    %c0_i32 = arith.constant 0 : i32
    %c0_i32_0 = arith.constant 0 : i32
    %c0_i32_1 = arith.constant 0 : i32
    return %arg0, %c0_i32, %c0_i32_0 : i32, i32, i32
  }
  func.func @transform_1(%arg0: i32) -> (i32, i32, i32) {
    %c0_i32 = arith.constant 0 : i32
    %c0_i32_0 = arith.constant 0 : i32
    %c0_i32_1 = arith.constant 0 : i32
    return %arg0, %c0_i32, %c0_i32_0 : i32, i32, i32
  }
  func.func @transform_2(%arg0: i32) -> (i32, i32, i32) {
    %c0_i32 = arith.constant 0 : i32
    %c0_i32_0 = arith.constant 0 : i32
    %c0_i32_1 = arith.constant 0 : i32
    return %arg0, %c0_i32, %c0_i32_0 : i32, i32, i32
  }
}

</mosaic_0001>

<llo_original>
// kernel: tpu_custom_call.1
$region0: #{tpu_custom_call.1}
  #allocation0 [shape = 'u32[]', space=smem, size = 0x4, offset = 0x4, fixed_abs, tag = 'smem constant byte address 0x4 - core index']
  #allocation1 [shape = 'u32[144,128]{1,0:T(1,128)}', space=vmem, size = 0x12000, scoped, tag = 'internal scratch']
  %s0 = inlined_call_operand.hbm [shape: f32[8,16,16], index: 0, kind: input, shape index: {}]
  %s1 = inlined_call_operand.hbm [shape: f32[8,16,16], index: 1, kind: input, shape index: {}]
  %s2 = inlined_call_operand.hbm [shape: f32[2,8,128], index: 2, kind: output, shape index: {}]
  %s3 = sld [smem:[#allocation0]]
  $region49: #{tpu_custom_call.1} parent=0
    _
  %s5 = ssub.s32 1, %s3
  %s6 = scalar_select 0, %s5, %s3
  $region1: #{tpu_custom_call.1} parent=0
    #allocation2 [shape = 'u8[65536]{0}', space=vmem, size = 0x10000, scoped, tag = 'input window, operand 0']
    #allocation3 [shape = 's32[2]{0}', space=sflag, size = 0x8, scoped, tag = 'scoped memory for tpu_custom_call.1']
    #allocation4 [shape = 's32[2]{0}', space=sflag, size = 0x8, scoped, tag = 'scoped memory for tpu_custom_call.1']
    #allocation5 [shape = 'u8[65536]{0}', space=vmem, size = 0x10000, scoped, tag = 'input window, operand 1']
    #allocation6 [shape = 's32[2]{0}', space=sflag, size = 0x8, scoped, tag = 'scoped memory for tpu_custom_call.1']
    #allocation7 [shape = 'u8[8192]{0}', space=vmem, size = 0x2000, scoped, tag = 'output window, operand 0']
    %7 = vsyncpa [#allocation3], 0
    %s8 = scalar_lea.sflag [#allocation3], 1
    %9 = vsyncpa %s8, 0
    %10 = vsyncpa [#allocation6], 0
    %s11 = scalar_lea.sflag [#allocation6], 1
    %12 = vsyncpa %s11, 0
    %13 = vsyncpa [#allocation4], 0
    %s14 = scalar_lea.sflag [#allocation4], 1
    %15 = vsyncpa %s14, 0
    loop: start=0, step=1, limit=4
    $region2: #{tpu_custom_call.1} parent=1 // loop_pre_header
      _
    $region3: #{tpu_custom_call.1} parent=1 // loop_header
      %s17 = sphi 0, %s21
      %p18 = scmp.ge.s32.totalorder %s17, 4
      %s27 = sphi 0, %s29
      %s30 = sphi 0, %s27
      %s31 = sphi 0, %s30
      %s47 = sphi 0, %s31
      %s53 = sphi 0, %s55
      %s56 = sphi 0, %s53
      %s57 = sphi 0, %s56
      %s73 = sphi 0, %s57
      %s79 = sphi 0, %s81
      %s82 = sphi 0, %s79
      %s83 = sphi 0, %s82
      %s99 = sphi 0, %s83
    $region4: #{tpu_custom_call.1} parent=1 // loop_header_branch
      %20 = sbr.rel (%p18) target = $region8
    $region5: #{tpu_custom_call.1} parent=1 // loop_body
      %s22 = ssub.s32 %s17, 1
      %s23 = ssub.s32 %s17, 2
      %s24 = sadd.s32 %s17, 1
      %s25 = ssub.s32 %s17, %s24
      %p26 = scmp.eq.s32.totalorder %s25, 0
      %s28 = sadd.s32 %s27, 1
      %s29 = scalar_select %p26, %s27, %s28
      %p32 = pneg %p26
      %p33 = scmp.eq.s32.totalorder %s17, 1
      %p34 = por %p32, %p33
      %p35 = scmp.ne.s32.totalorder %s27, %s30
      %p36 = scmp.eq.s32.totalorder %s17, 0
      %p37 = por %p35, %p36
      %p38 = scmp.ne.s32.totalorder %s27, %s30
      %p39 = scmp.eq.s32.totalorder %s22, 1
      %p40 = por %p38, %p39
      %p41 = scmp.ne.s32.totalorder %s30, %s31
      %p42 = scmp.eq.s32.totalorder %s22, 0
      %p43 = por %p41, %p42
      %p44 = scmp.ne.s32.totalorder %s30, %s31
      %p45 = scmp.eq.s32.totalorder %s23, 1
      %p46 = por %p44, %p45
      %p48 = scmp.ne.s32.totalorder %s31, %s47
      %p49 = scmp.eq.s32.totalorder %s23, 0
      %p50 = por %p48, %p49
      %s51 = ssub.s32 %s17, %s24
      %p52 = scmp.eq.s32.totalorder %s51, 0
      %s54 = sadd.s32 %s53, 1
      %s55 = scalar_select %p52, %s53, %s54
      %p58 = pneg %p52
      %p59 = scmp.eq.s32.totalorder %s17, 1
      %p60 = por %p58, %p59
      %p61 = scmp.ne.s32.totalorder %s53, %s56
      %p62 = scmp.eq.s32.totalorder %s17, 0
      %p63 = por %p61, %p62
      %p64 = scmp.ne.s32.totalorder %s53, %s56
      %p65 = scmp.eq.s32.totalorder %s22, 1
      %p66 = por %p64, %p65
      %p67 = scmp.ne.s32.totalorder %s56, %s57
      %p68 = scmp.eq.s32.totalorder %s22, 0
      %p69 = por %p67, %p68
      %p70 = scmp.ne.s32.totalorder %s56, %s57
      %p71 = scmp.eq.s32.totalorder %s23, 1
      %p72 = por %p70, %p71
      %p74 = scmp.ne.s32.totalorder %s57, %s73
      %p75 = scmp.eq.s32.totalorder %s23, 0
      %p76 = por %p74, %p75
      %s77 = ssub.s32 %s17, %s24
      %p78 = scmp.eq.s32.totalorder %s77, 0
      %s80 = sadd.s32 %s79, 1
      %s81 = scalar_select %p78, %s79, %s80
      %p84 = pneg %p78
      %p85 = scmp.eq.s32.totalorder %s17, 1
      %p86 = por %p84, %p85
      %p87 = scmp.ne.s32.totalorder %s79, %s82
      %p88 = scmp.eq.s32.totalorder %s17, 0
      %p89 = por %p87, %p88
      %p90 = scmp.ne.s32.totalorder %s79, %s82
      %p91 = scmp.eq.s32.totalorder %s22, 1
      %p92 = por %p90, %p91
      %p93 = scmp.ne.s32.totalorder %s82, %s83
      %p94 = scmp.eq.s32.totalorder %s22, 0
      %p95 = por %p93, %p94
      %p96 = scmp.ne.s32.totalorder %s82, %s83
      %p97 = scmp.eq.s32.totalorder %s23, 1
      %p98 = por %p96, %p97
      %p100 = scmp.ne.s32.totalorder %s83, %s99
      %p101 = scmp.eq.s32.totalorder %s23, 0
      %p102 = por %p100, %p101
      %p103 = scmp.le.s32.totalorder 1, %s17
      %p104 = scmp.lt.s32.totalorder %s17, 3
      %p105 = pnand %p103, %p104
      %p106 = pneg %p105
      // Predicated region
      $region9: #{tpu_custom_call.1} parent=5 // pred_check
        _
      $region10: #{tpu_custom_call.1} parent=5 // pred_check_branch
        %108 = sbr.rel (%p105) target = $region12
      $region11: #{tpu_custom_call.1} parent=5 // pred_region
        %s109 = ssub.s32 %s17, 1
      $region12: #{tpu_custom_call.1} parent=5 // pred_fallthru
        _
      %p110 = scmp.lt.s32.totalorder %s17, 2
      // Predicated region
      $region13: #{tpu_custom_call.1} parent=5 // pred_check
        %p111 = pneg %p110
      $region14: #{tpu_custom_call.1} parent=5 // pred_check_branch
        %113 = sbr.rel (%p111) target = $region16
      $region15: #{tpu_custom_call.1} parent=5 // pred_region
        // Predicated region
        $region17: #{tpu_custom_call.1} parent=15 // pred_check
          %p114 = pneg %p37
        $region18: #{tpu_custom_call.1} parent=15 // pred_check_branch
          %116 = sbr.rel (%p114) target = $region20
        $region19: #{tpu_custom_call.1} parent=15 // pred_region
          %s117 = sand.u32 %s27, 1
          %s118 = scalar_lea.sflag [#allocation3], %s117
          %s119 = sand.u32 %s27, 1
          %s120 = smul.addr %s119, 64
          %s121 = scalar_lea.vmem [#allocation2], %s120
          %s122 = smul.u32 4, %s17
          %s124 = ssub.s32 1024, 1024
          %125 = vsyncadd %s118, %s124
          %s126 = smul.addr %s122, 2
          %s127 = smul.addr %s126, 128
          %s128 = scalar_lea.hbm %s0, %s127
          %s129 = sshll.u32 %s121, 4
          %s130 = int_to_ptr.vmem [resolvable:$true] %s129
          %135 = dma.hbm_to_vmem [thread:$0]  %s128, 1024, %s130, %s118, 128, 128, 8
        $region20: #{tpu_custom_call.1} parent=15 // pred_fallthru
          _
        // Predicated region
        $region21: #{tpu_custom_call.1} parent=15 // pred_check
          %p136 = pneg %p63
        $region22: #{tpu_custom_call.1} parent=15 // pred_check_branch
          %138 = sbr.rel (%p136) target = $region24
        $region23: #{tpu_custom_call.1} parent=15 // pred_region
          %s139 = sand.u32 %s53, 1
          %s140 = scalar_lea.sflag [#allocation6], %s139
          %s141 = sand.u32 %s53, 1
          %s142 = smul.addr %s141, 64
          %s143 = scalar_lea.vmem [#allocation5], %s142
          %s144 = smul.u32 4, %s17
          %s146 = ssub.s32 1024, 1024
          %147 = vsyncadd %s140, %s146
          %s148 = smul.addr %s144, 2
          %s149 = smul.addr %s148, 128
          %s150 = scalar_lea.hbm %s1, %s149
          %s151 = sshll.u32 %s143, 4
          %s152 = int_to_ptr.vmem [resolvable:$true] %s151
          %157 = dma.hbm_to_vmem [thread:$0]  %s150, 1024, %s152, %s140, 128, 128, 8
        $region24: #{tpu_custom_call.1} parent=15 // pred_fallthru
          _
      $region16: #{tpu_custom_call.1} parent=5 // pred_fallthru
        _
      %p158 = scmp.le.s32.totalorder 1, %s17
      %p159 = scmp.lt.s32.totalorder %s17, 3
      %p160 = pnand %p158, %p159
      %p161 = pneg %p160
      // Predicated region
      $region25: #{tpu_custom_call.1} parent=5 // pred_check
        _
      $region26: #{tpu_custom_call.1} parent=5 // pred_check_branch
        %163 = sbr.rel (%p160) target = $region28
      $region27: #{tpu_custom_call.1} parent=5 // pred_region
        %s164 = ssub.s32 %s17, 1
        %s165 = sand.u32 %s30, 1
        %s166 = scalar_lea.sflag [#allocation3], %s165
        %s167 = sand.u32 %s30, 1
        %s168 = smul.addr %s167, 64
        %s169 = scalar_lea.vmem [#allocation2], %s168
        // Predicated region
        $region29: #{tpu_custom_call.1} parent=27 // pred_check
          %p170 = pneg %p43
        $region30: #{tpu_custom_call.1} parent=27 // pred_check_branch
          %172 = sbr.rel (%p170) target = $region32
        $region31: #{tpu_custom_call.1} parent=27 // pred_region
          %173 = dma.done %s166, 1024
        $region32: #{tpu_custom_call.1} parent=27 // pred_fallthru
          _
        %s174 = sand.u32 %s56, 1
        %s175 = scalar_lea.sflag [#allocation6], %s174
        %s176 = sand.u32 %s56, 1
        %s177 = smul.addr %s176, 64
        %s178 = scalar_lea.vmem [#allocation5], %s177
        // Predicated region
        $region33: #{tpu_custom_call.1} parent=27 // pred_check
          %p179 = pneg %p69
        $region34: #{tpu_custom_call.1} parent=27 // pred_check_branch
          %181 = sbr.rel (%p179) target = $region36
        $region35: #{tpu_custom_call.1} parent=27 // pred_region
          %182 = dma.done %s175, 1024
        $region36: #{tpu_custom_call.1} parent=27 // pred_fallthru
          _
        %s183 = sand.u32 %s30, 1
        %s184 = scalar_lea.sflag [#allocation3], %s183
        %s185 = sand.u32 %s30, 1
        %s186 = smul.addr %s185, 64
        %s187 = scalar_lea.vmem [#allocation2], %s186
        %p188 = pneg %p43
        %p189 = pneg %p40
        %s190 = sand.u32 %s56, 1
        %s191 = scalar_lea.sflag [#allocation6], %s190
        %s192 = sand.u32 %s56, 1
        %s193 = smul.addr %s192, 64
        %s194 = scalar_lea.vmem [#allocation5], %s193
        %p195 = pneg %p69
        %p196 = pneg %p66
        %p197 = pneg %p95
        %p198 = pneg %p92
        %s199 = sand.u32 %s82, 1
        %s200 = scalar_lea.sflag [#allocation4], %s199
        %s201 = sand.u32 %s82, 1
        %s202 = smul.addr %s201, 8
        %s203 = scalar_lea.vmem [#allocation7], %s202
        %s204 = smul.u32 4, %s22
        %s205 = smul.u32 4, %s22
        %v206 = vld [vmem:[%s169] sm:$0xff]
        %v207 = vld [vmem:[%s169 + $0x8] sm:$0xff]
        %v208 = vld [vmem:[%s169 + $0x10] sm:$0xff]
        %v209 = vld [vmem:[%s169 + $0x18] sm:$0xff]
        %v210 = vld [vmem:[%s169 + $0x20] sm:$0xff]
        %v211 = vld [vmem:[%s169 + $0x28] sm:$0xff]
        %v212 = vld [vmem:[%s169 + $0x30] sm:$0xff]
        %v213 = vld [vmem:[%s169 + $0x38] sm:$0xff]
        %v214 = vld [vmem:[%s178] sm:$0xff]
        %v215 = vld [vmem:[%s178 + $0x8] sm:$0xff]
        %v216 = vld [vmem:[%s178 + $0x10] sm:$0xff]
        %v217 = vld [vmem:[%s178 + $0x18] sm:$0xff]
        %v218 = vld [vmem:[%s178 + $0x20] sm:$0xff]
        %v219 = vld [vmem:[%s178 + $0x28] sm:$0xff]
        %v220 = vld [vmem:[%s178 + $0x30] sm:$0xff]
        %v221 = vld [vmem:[%s178 + $0x38] sm:$0xff]
        %v222 = vlaneseq
        %v223 = vshrl.u32 %v222, 7
        %v224 = vadd.s32 %v223, 8
        %v225 = vlaneseq
        %v226 = vand.u32 %v225, 127
        %v227 = vrot.slane %v214, 7
        %v228 = vrot.slane %v216, 7
        %v229 = vrot.slane %v218, 7
        %v230 = vrot.slane %v220, 7
        %v231 = vrot.slane %v215, 7
        %v232 = vrot.slane %v217, 7
        %v233 = vrot.slane %v219, 7
        %v234 = vrot.slane %v221, 7
        %vm235 = vcmp.lt.s32.totalorder %v223, 1
        %v236 = vsel %vm235, %v227, %v231
        %v237 = vsel %vm235, %v228, %v232
        %v238 = vsel %vm235, %v229, %v233
        %v239 = vsel %vm235, %v230, %v234
        %v240 = vsel %vm235, %v231, %v227
        %v241 = vsel %vm235, %v232, %v228
        %v242 = vsel %vm235, %v233, %v229
        %v243 = vsel %vm235, %v234, %v230
        %vm244 = vcmp.lt.s32.totalorder %v224, 1
        %v245 = vsel %vm235, 1, 0
        %v246 = vsel %vm244, 1, 0
        %vm247 = vcmp.eq.s32.totalorder %v245, 1
        %vm248 = vcmp.eq.s32.totalorder %v246, 1
        %v249 = vsel %vm247, inf, %v240
        %v250 = vsel %vm248, inf, %v236
        %v251 = vsel %vm247, inf, %v241
        %v252 = vsel %vm248, inf, %v237
        %v253 = vsel %vm247, inf, %v242
        %v254 = vsel %vm248, inf, %v238
        %v255 = vsel %vm247, inf, %v243
        %v256 = vsel %vm248, inf, %v239
        %vm257 = vcmask 1047680
        %258 = vrot.lane.b32.xlu0 %v249, 16
        %v259 = vpop.permute.xlu0 %258
        %v260 = vsel %vm257, %v259, %v249
        %261 = vrot.lane.b32.xlu0 %v250, 16
        %v262 = vpop.permute.xlu0 %261
        %v263 = vsel %vm257, %v262, %v250
        %264 = vrot.lane.b32.xlu0 %v251, 16
        %v265 = vpop.permute.xlu0 %264
        %v266 = vsel %vm257, %v265, %v251
        %267 = vrot.lane.b32.xlu0 %v252, 16
        %v268 = vpop.permute.xlu0 %267
        %v269 = vsel %vm257, %v268, %v252
        %270 = vrot.lane.b32.xlu0 %v253, 16
        %v271 = vpop.permute.xlu0 %270
        %v272 = vsel %vm257, %v271, %v253
        %273 = vrot.lane.b32.xlu0 %v254, 16
        %v274 = vpop.permute.xlu0 %273
        %v275 = vsel %vm257, %v274, %v254
        %276 = vrot.lane.b32.xlu0 %v255, 16
        %v277 = vpop.permute.xlu0 %276
        %v278 = vsel %vm257, %v277, %v255
        %279 = vrot.lane.b32.xlu0 %v256, 16
        %v280 = vpop.permute.xlu0 %279
        %v281 = vsel %vm257, %v280, %v256
        %282 = vrot.lane.b32.xlu0 %v260, 16
        %v283 = vpop.permute.xlu0 %282
        %284 = vrot.lane.b32.xlu0 %v263, 16
        %v285 = vpop.permute.xlu0 %284
        %286 = vrot.lane.b32.xlu0 %v266, 16
        %v287 = vpop.permute.xlu0 %286
        %288 = vrot.lane.b32.xlu0 %v269, 16
        %v289 = vpop.permute.xlu0 %288
        %290 = vrot.lane.b32.xlu0 %v272, 16
        %v291 = vpop.permute.xlu0 %290
        %292 = vrot.lane.b32.xlu0 %v275, 16
        %v293 = vpop.permute.xlu0 %292
        %294 = vrot.lane.b32.xlu0 %v278, 16
        %v295 = vpop.permute.xlu0 %294
        %296 = vrot.lane.b32.xlu0 %v281, 16
        %v297 = vpop.permute.xlu0 %296
        %v298 = vsel %vm257, %v283, %v249
        %v299 = vsel %vm257, %v285, %v250
        %v300 = vsel %vm257, %v287, %v251
        %v301 = vsel %vm257, %v289, %v252
        %v302 = vsel %vm257, %v291, %v253
        %v303 = vsel %vm257, %v293, %v254
        %v304 = vsel %vm257, %v295, %v255
        %v305 = vsel %vm257, %v297, %v256
        %vm306 = vcmp.lt.s32.totalorder %v226, 1
        %v307 = vsel %vm306, 1, 0
        %vm308 = vcmp.eq.s32.totalorder %v307, 1
        %317 = vrot.lane.b32.xlu0 %v298, 113
        %v318 = vpop.permute.xlu0 %317
        %319 = vrot.lane.b32.xlu0 %v299, 113
        %v320 = vpop.permute.xlu0 %319
        %321 = vrot.lane.b32.xlu0 %v300, 113
        %v322 = vpop.permute.xlu0 %321
        %323 = vrot.lane.b32.xlu0 %v301, 113
        %v324 = vpop.permute.xlu0 %323
        %325 = vrot.lane.b32.xlu0 %v302, 113
        %v326 = vpop.permute.xlu0 %325
        %327 = vrot.lane.b32.xlu0 %v303, 113
        %v328 = vpop.permute.xlu0 %327
        %329 = vrot.lane.b32.xlu0 %v304, 113
        %v330 = vpop.permute.xlu0 %329
        %331 = vrot.lane.b32.xlu0 %v305, 113
        %v332 = vpop.permute.xlu0 %331
        %v341 = vsel %vm308, inf, %v318
        %v342 = vsel %vm308, inf, %v320
        %v343 = vsel %vm308, inf, %v322
        %v344 = vsel %vm308, inf, %v324
        %v345 = vsel %vm308, inf, %v326
        %v346 = vsel %vm308, inf, %v328
        %v347 = vsel %vm308, inf, %v330
        %v348 = vsel %vm308, inf, %v332
        %v349 = vsub.f32 %v341, %v206
        %v350 = vsub.f32 %v342, %v207
        %v351 = vsub.f32 %v343, %v208
        %v352 = vsub.f32 %v344, %v209
        %v353 = vsub.f32 %v345, %v210
        %v354 = vsub.f32 %v346, %v211
        %v355 = vsub.f32 %v347, %v212
        %v356 = vsub.f32 %v348, %v213
        %v357 = vmul.f32 %v349, %v349
        %v358 = vmul.f32 %v350, %v350
        %v359 = vmul.f32 %v351, %v351
        %v360 = vmul.f32 %v352, %v352
        %v361 = vmul.f32 %v353, %v353
        %v362 = vmul.f32 %v354, %v354
        %v363 = vmul.f32 %v355, %v355
        %v364 = vmul.f32 %v356, %v356
        %v365 = vsub.f32 %v249, %v206
        %v366 = vsub.f32 %v250, %v207
        %v367 = vsub.f32 %v251, %v208
        %v368 = vsub.f32 %v252, %v209
        %v369 = vsub.f32 %v253, %v210
        %v370 = vsub.f32 %v254, %v211
        %v371 = vsub.f32 %v255, %v212
        %v372 = vsub.f32 %v256, %v213
        %v373 = vmul.f32 %v365, %v365
        %v374 = vmul.f32 %v366, %v366
        %v375 = vmul.f32 %v367, %v367
        %v376 = vmul.f32 %v368, %v368
        %v377 = vmul.f32 %v369, %v369
        %v378 = vmul.f32 %v370, %v370
        %v379 = vmul.f32 %v371, %v371
        %v380 = vmul.f32 %v372, %v372
        %v381 = vmin.f32 %v357, %v373
        %v382 = vmin.f32 %v358, %v374
        %v383 = vmin.f32 %v359, %v375
        %v384 = vmin.f32 %v360, %v376
        %v385 = vmin.f32 %v361, %v377
        %v386 = vmin.f32 %v362, %v378
        %v387 = vmin.f32 %v363, %v379
        %v388 = vmin.f32 %v364, %v380
        %vm389 = vcmp.ge.s32.totalorder %v226, 15
        %v390 = vsel %vm389, 1, 0
        %vm391 = vcmp.eq.s32.totalorder %v390, 1
        %392 = vrot.lane.b32.xlu0 %v298, 127
        %v393 = vpop.permute.xlu0 %392
        %394 = vrot.lane.b32.xlu0 %v299, 127
        %v395 = vpop.permute.xlu0 %394
        %396 = vrot.lane.b32.xlu0 %v300, 127
        %v397 = vpop.permute.xlu0 %396
        %398 = vrot.lane.b32.xlu0 %v301, 127
        %v399 = vpop.permute.xlu0 %398
        %400 = vrot.lane.b32.xlu0 %v302, 127
        %v401 = vpop.permute.xlu0 %400
        %402 = vrot.lane.b32.xlu0 %v303, 127
        %v403 = vpop.permute.xlu0 %402
        %404 = vrot.lane.b32.xlu0 %v304, 127
        %v405 = vpop.permute.xlu0 %404
        %406 = vrot.lane.b32.xlu0 %v305, 127
        %v407 = vpop.permute.xlu0 %406
        %v416 = vsel %vm391, inf, %v393
        %v417 = vsel %vm391, inf, %v395
        %v418 = vsel %vm391, inf, %v397
        %v419 = vsel %vm391, inf, %v399
        %v420 = vsel %vm391, inf, %v401
        %v421 = vsel %vm391, inf, %v403
        %v422 = vsel %vm391, inf, %v405
        %v423 = vsel %vm391, inf, %v407
        %v424 = vsub.f32 %v416, %v206
        %v425 = vsub.f32 %v417, %v207
        %v426 = vsub.f32 %v418, %v208
        %v427 = vsub.f32 %v419, %v209
        %v428 = vsub.f32 %v420, %v210
        %v429 = vsub.f32 %v421, %v211
        %v430 = vsub.f32 %v422, %v212
        %v431 = vsub.f32 %v423, %v213
        %v432 = vmul.f32 %v424, %v424
        %v433 = vmul.f32 %v425, %v425
        %v434 = vmul.f32 %v426, %v426
        %v435 = vmul.f32 %v427, %v427
        %v436 = vmul.f32 %v428, %v428
        %v437 = vmul.f32 %v429, %v429
        %v438 = vmul.f32 %v430, %v430
        %v439 = vmul.f32 %v431, %v431
        %v440 = vmin.f32 %v381, %v432
        %v441 = vmin.f32 %v382, %v433
        %v442 = vmin.f32 %v383, %v434
        %v443 = vmin.f32 %v384, %v435
        %v444 = vmin.f32 %v385, %v436
        %v445 = vmin.f32 %v386, %v437
        %v446 = vmin.f32 %v387, %v438
        %v447 = vmin.f32 %v388, %v439
        %448 = vrot.lane.b32.xlu0 %v214, 16
        %v449 = vpop.permute.xlu0 %448
        %v450 = vsel %vm257, %v449, %v214
        %451 = vrot.lane.b32.xlu0 %v215, 16
        %v452 = vpop.permute.xlu0 %451
        %v453 = vsel %vm257, %v452, %v215
        %454 = vrot.lane.b32.xlu0 %v216, 16
        %v455 = vpop.permute.xlu0 %454
        %v456 = vsel %vm257, %v455, %v216
        %457 = vrot.lane.b32.xlu0 %v217, 16
        %v458 = vpop.permute.xlu0 %457
        %v459 = vsel %vm257, %v458, %v217
        %460 = vrot.lane.b32.xlu0 %v218, 16
        %v461 = vpop.permute.xlu0 %460
        %v462 = vsel %vm257, %v461, %v218
        %463 = vrot.lane.b32.xlu0 %v219, 16
        %v464 = vpop.permute.xlu0 %463
        %v465 = vsel %vm257, %v464, %v219
        %466 = vrot.lane.b32.xlu0 %v220, 16
        %v467 = vpop.permute.xlu0 %466
        %v468 = vsel %vm257, %v467, %v220
        %469 = vrot.lane.b32.xlu0 %v221, 16
        %v470 = vpop.permute.xlu0 %469
        %v471 = vsel %vm257, %v470, %v221
        %472 = vrot.lane.b32.xlu0 %v450, 16
        %v473 = vpop.permute.xlu0 %472
        %474 = vrot.lane.b32.xlu0 %v453, 16
        %v475 = vpop.permute.xlu0 %474
        %476 = vrot.lane.b32.xlu0 %v456, 16
        %v477 = vpop.permute.xlu0 %476
        %478 = vrot.lane.b32.xlu0 %v459, 16
        %v479 = vpop.permute.xlu0 %478
        %480 = vrot.lane.b32.xlu0 %v462, 16
        %v481 = vpop.permute.xlu0 %480
        %482 = vrot.lane.b32.xlu0 %v465, 16
        %v483 = vpop.permute.xlu0 %482
        %484 = vrot.lane.b32.xlu0 %v468, 16
        %v485 = vpop.permute.xlu0 %484
        %486 = vrot.lane.b32.xlu0 %v471, 16
        %v487 = vpop.permute.xlu0 %486
        %v488 = vsel %vm257, %v473, %v214
        %v489 = vsel %vm257, %v475, %v215
        %v490 = vsel %vm257, %v477, %v216
        %v491 = vsel %vm257, %v479, %v217
        %v492 = vsel %vm257, %v481, %v218
        %v493 = vsel %vm257, %v483, %v219
        %v494 = vsel %vm257, %v485, %v220
        %v495 = vsel %vm257, %v487, %v221
        %504 = vrot.lane.b32.xlu0 %v488, 113
        %v505 = vpop.permute.xlu0 %504
        %506 = vrot.lane.b32.xlu0 %v489, 113
        %v507 = vpop.permute.xlu0 %506
        %508 = vrot.lane.b32.xlu0 %v490, 113
        %v509 = vpop.permute.xlu0 %508
        %510 = vrot.lane.b32.xlu0 %v491, 113
        %v511 = vpop.permute.xlu0 %510
        %512 = vrot.lane.b32.xlu0 %v492, 113
        %v513 = vpop.permute.xlu0 %512
        %514 = vrot.lane.b32.xlu0 %v493, 113
        %v515 = vpop.permute.xlu0 %514
        %516 = vrot.lane.b32.xlu0 %v494, 113
        %v517 = vpop.permute.xlu0 %516
        %518 = vrot.lane.b32.xlu0 %v495, 113
        %v519 = vpop.permute.xlu0 %518
        %v528 = vsel %vm308, inf, %v505
        %v529 = vsel %vm308, inf, %v507
        %v530 = vsel %vm308, inf, %v509
        %v531 = vsel %vm308, inf, %v511
        %v532 = vsel %vm308, inf, %v513
        %v533 = vsel %vm308, inf, %v515
        %v534 = vsel %vm308, inf, %v517
        %v535 = vsel %vm308, inf, %v519
        %v536 = vsub.f32 %v528, %v206
        %v537 = vsub.f32 %v529, %v207
        %v538 = vsub.f32 %v530, %v208
        %v539 = vsub.f32 %v531, %v209
        %v540 = vsub.f32 %v532, %v210
        %v541 = vsub.f32 %v533, %v211
        %v542 = vsub.f32 %v534, %v212
        %v543 = vsub.f32 %v535, %v213
        %v544 = vmul.f32 %v536, %v536
        %v545 = vmul.f32 %v537, %v537
        %v546 = vmul.f32 %v538, %v538
        %v547 = vmul.f32 %v539, %v539
        %v548 = vmul.f32 %v540, %v540
        %v549 = vmul.f32 %v541, %v541
        %v550 = vmul.f32 %v542, %v542
        %v551 = vmul.f32 %v543, %v543
        %v552 = vmin.f32 %v440, %v544
        %v553 = vmin.f32 %v441, %v545
        %v554 = vmin.f32 %v442, %v546
        %v555 = vmin.f32 %v443, %v547
        %v556 = vmin.f32 %v444, %v548
        %v557 = vmin.f32 %v445, %v549
        %v558 = vmin.f32 %v446, %v550
        %v559 = vmin.f32 %v447, %v551
        %v560 = vsub.f32 %v214, %v206
        %v561 = vsub.f32 %v215, %v207
        %v562 = vsub.f32 %v216, %v208
        %v563 = vsub.f32 %v217, %v209
        %v564 = vsub.f32 %v218, %v210
        %v565 = vsub.f32 %v219, %v211
        %v566 = vsub.f32 %v220, %v212
        %v567 = vsub.f32 %v221, %v213
        %v568 = vmul.f32 %v560, %v560
        %v569 = vmul.f32 %v561, %v561
        %v570 = vmul.f32 %v562, %v562
        %v571 = vmul.f32 %v563, %v563
        %v572 = vmul.f32 %v564, %v564
        %v573 = vmul.f32 %v565, %v565
        %v574 = vmul.f32 %v566, %v566
        %v575 = vmul.f32 %v567, %v567
        %v576 = vmin.f32 %v552, %v568
        %v577 = vmin.f32 %v553, %v569
        %v578 = vmin.f32 %v554, %v570
        %v579 = vmin.f32 %v555, %v571
        %v580 = vmin.f32 %v556, %v572
        %v581 = vmin.f32 %v557, %v573
        %v582 = vmin.f32 %v558, %v574
        %v583 = vmin.f32 %v559, %v575
        %584 = vrot.lane.b32.xlu0 %v488, 127
        %v585 = vpop.permute.xlu0 %584
        %586 = vrot.lane.b32.xlu0 %v489, 127
        %v587 = vpop.permute.xlu0 %586
        %588 = vrot.lane.b32.xlu0 %v490, 127
        %v589 = vpop.permute.xlu0 %588
        %590 = vrot.lane.b32.xlu0 %v491, 127
        %v591 = vpop.permute.xlu0 %590
        %592 = vrot.lane.b32.xlu0 %v492, 127
        %v593 = vpop.permute.xlu0 %592
        %594 = vrot.lane.b32.xlu0 %v493, 127
        %v595 = vpop.permute.xlu0 %594
        %596 = vrot.lane.b32.xlu0 %v494, 127
        %v597 = vpop.permute.xlu0 %596
        %598 = vrot.lane.b32.xlu0 %v495, 127
        %v599 = vpop.permute.xlu0 %598
        %v608 = vsel %vm391, inf, %v585
        %v609 = vsel %vm391, inf, %v587
        %v610 = vsel %vm391, inf, %v589
        %v611 = vsel %vm391, inf, %v591
        %v612 = vsel %vm391, inf, %v593
        %v613 = vsel %vm391, inf, %v595
        %v614 = vsel %vm391, inf, %v597
        %v615 = vsel %vm391, inf, %v599
        %v616 = vsub.f32 %v608, %v206
        %v617 = vsub.f32 %v609, %v207
        %v618 = vsub.f32 %v610, %v208
        %v619 = vsub.f32 %v611, %v209
        %v620 = vsub.f32 %v612, %v210
        %v621 = vsub.f32 %v613, %v211
        %v622 = vsub.f32 %v614, %v212
        %v623 = vsub.f32 %v615, %v213
        %v624 = vmul.f32 %v616, %v616
        %v625 = vmul.f32 %v617, %v617
        %v626 = vmul.f32 %v618, %v618
        %v627 = vmul.f32 %v619, %v619
        %v628 = vmul.f32 %v620, %v620
        %v629 = vmul.f32 %v621, %v621
        %v630 = vmul.f32 %v622, %v622
        %v631 = vmul.f32 %v623, %v623
        %v632 = vmin.f32 %v576, %v624
        %v633 = vmin.f32 %v577, %v625
        %v634 = vmin.f32 %v578, %v626
        %v635 = vmin.f32 %v579, %v627
        %v636 = vmin.f32 %v580, %v628
        %v637 = vmin.f32 %v581, %v629
        %v638 = vmin.f32 %v582, %v630
        %v639 = vmin.f32 %v583, %v631
        %v640 = vrot.slane %v214, 1
        %v641 = vrot.slane %v216, 1
        %v642 = vrot.slane %v218, 1
        %v643 = vrot.slane %v220, 1
        %v644 = vrot.slane %v215, 1
        %v645 = vrot.slane %v217, 1
        %v646 = vrot.slane %v219, 1
        %v647 = vrot.slane %v221, 1
        %vm648 = vcmp.lt.s32.totalorder %v223, 7
        %v649 = vsel %vm648, %v640, %v644
        %v650 = vsel %vm648, %v641, %v645
        %v651 = vsel %vm648, %v642, %v646
        %v652 = vsel %vm648, %v643, %v647
        %v653 = vsel %vm648, %v644, %v640
        %v654 = vsel %vm648, %v645, %v641
        %v655 = vsel %vm648, %v646, %v642
        %v656 = vsel %vm648, %v647, %v643
        %vm657 = vcmp.ge.s32.totalorder %v223, 15
        %vm658 = vcmp.ge.s32.totalorder %v224, 15
        %v659 = vsel %vm657, 1, 0
        %v660 = vsel %vm658, 1, 0
        %vm661 = vcmp.eq.s32.totalorder %v659, 1
        %vm662 = vcmp.eq.s32.totalorder %v660, 1
        %v663 = vsel %vm661, inf, %v649
        %v664 = vsel %vm662, inf, %v653
        %v665 = vsel %vm661, inf, %v650
        %v666 = vsel %vm662, inf, %v654
        %v667 = vsel %vm661, inf, %v651
        %v668 = vsel %vm662, inf, %v655
        %v669 = vsel %vm661, inf, %v652
        %v670 = vsel %vm662, inf, %v656
        %671 = vrot.lane.b32.xlu0 %v663, 16
        %v672 = vpop.permute.xlu0 %671
        %v673 = vsel %vm257, %v672, %v663
        %674 = vrot.lane.b32.xlu0 %v664, 16
        %v675 = vpop.permute.xlu0 %674
        %v676 = vsel %vm257, %v675, %v664
        %677 = vrot.lane.b32.xlu0 %v665, 16
        %v678 = vpop.permute.xlu0 %677
        %v679 = vsel %vm257, %v678, %v665
        %680 = vrot.lane.b32.xlu0 %v666, 16
        %v681 = vpop.permute.xlu0 %680
        %v682 = vsel %vm257, %v681, %v666
        %683 = vrot.lane.b32.xlu0 %v667, 16
        %v684 = vpop.permute.xlu0 %683
        %v685 = vsel %vm257, %v684, %v667
        %686 = vrot.lane.b32.xlu0 %v668, 16
        %v687 = vpop.permute.xlu0 %686
        %v688 = vsel %vm257, %v687, %v668
        %689 = vrot.lane.b32.xlu0 %v669, 16
        %v690 = vpop.permute.xlu0 %689
        %v691 = vsel %vm257, %v690, %v669
        %692 = vrot.lane.b32.xlu0 %v670, 16
        %v693 = vpop.permute.xlu0 %692
        %v694 = vsel %vm257, %v693, %v670
        %695 = vrot.lane.b32.xlu0 %v673, 16
        %v696 = vpop.permute.xlu0 %695
        %697 = vrot.lane.b32.xlu0 %v676, 16
        %v698 = vpop.permute.xlu0 %697
        %699 = vrot.lane.b32.xlu0 %v679, 16
        %v700 = vpop.permute.xlu0 %699
        %701 = vrot.lane.b32.xlu0 %v682, 16
        %v702 = vpop.permute.xlu0 %701
        %703 = vrot.lane.b32.xlu0 %v685, 16
        %v704 = vpop.permute.xlu0 %703
        %705 = vrot.lane.b32.xlu0 %v688, 16
        %v706 = vpop.permute.xlu0 %705
        %707 = vrot.lane.b32.xlu0 %v691, 16
        %v708 = vpop.permute.xlu0 %707
        %709 = vrot.lane.b32.xlu0 %v694, 16
        %v710 = vpop.permute.xlu0 %709
        %v711 = vsel %vm257, %v696, %v663
        %v712 = vsel %vm257, %v698, %v664
        %v713 = vsel %vm257, %v700, %v665
        %v714 = vsel %vm257, %v702, %v666
        %v715 = vsel %vm257, %v704, %v667
        %v716 = vsel %vm257, %v706, %v668
        %v717 = vsel %vm257, %v708, %v669
        %v718 = vsel %vm257, %v710, %v670
        %727 = vrot.lane.b32.xlu0 %v711, 113
        %v728 = vpop.permute.xlu0 %727
        %729 = vrot.lane.b32.xlu0 %v712, 113
        %v730 = vpop.permute.xlu0 %729
        %731 = vrot.lane.b32.xlu0 %v713, 113
        %v732 = vpop.permute.xlu0 %731
        %733 = vrot.lane.b32.xlu0 %v714, 113
        %v734 = vpop.permute.xlu0 %733
        %735 = vrot.lane.b32.xlu0 %v715, 113
        %v736 = vpop.permute.xlu0 %735
        %737 = vrot.lane.b32.xlu0 %v716, 113
        %v738 = vpop.permute.xlu0 %737
        %739 = vrot.lane.b32.xlu0 %v717, 113
        %v740 = vpop.permute.xlu0 %739
        %741 = vrot.lane.b32.xlu0 %v718, 113
        %v742 = vpop.permute.xlu0 %741
        %v751 = vsel %vm308, inf, %v728
        %v752 = vsel %vm308, inf, %v730
        %v753 = vsel %vm308, inf, %v732
        %v754 = vsel %vm308, inf, %v734
        %v755 = vsel %vm308, inf, %v736
        %v756 = vsel %vm308, inf, %v738
        %v757 = vsel %vm308, inf, %v740
        %v758 = vsel %vm308, inf, %v742
        %v759 = vsub.f32 %v751, %v206
        %v760 = vsub.f32 %v752, %v207
        %v761 = vsub.f32 %v753, %v208
        %v762 = vsub.f32 %v754, %v209
        %v763 = vsub.f32 %v755, %v210
        %v764 = vsub.f32 %v756, %v211
        %v765 = vsub.f32 %v757, %v212
        %v766 = vsub.f32 %v758, %v213
        %v767 = vmul.f32 %v759, %v759
        %v768 = vmul.f32 %v760, %v760
        %v769 = vmul.f32 %v761, %v761
        %v770 = vmul.f32 %v762, %v762
        %v771 = vmul.f32 %v763, %v763
        %v772 = vmul.f32 %v764, %v764
        %v773 = vmul.f32 %v765, %v765
        %v774 = vmul.f32 %v766, %v766
        %v775 = vmin.f32 %v632, %v767
        %v776 = vmin.f32 %v633, %v768
        %v777 = vmin.f32 %v634, %v769
        %v778 = vmin.f32 %v635, %v770
        %v779 = vmin.f32 %v636, %v771
        %v780 = vmin.f32 %v637, %v772
        %v781 = vmin.f32 %v638, %v773
        %v782 = vmin.f32 %v639, %v774
        %v783 = vsub.f32 %v663, %v206
        %v784 = vsub.f32 %v664, %v207
        %v785 = vsub.f32 %v665, %v208
        %v786 = vsub.f32 %v666, %v209
        %v787 = vsub.f32 %v667, %v210
        %v788 = vsub.f32 %v668, %v211
        %v789 = vsub.f32 %v669, %v212
        %v790 = vsub.f32 %v670, %v213
        %v791 = vmul.f32 %v783, %v783
        %v792 = vmul.f32 %v784, %v784
        %v793 = vmul.f32 %v785, %v785
        %v794 = vmul.f32 %v786, %v786
        %v795 = vmul.f32 %v787, %v787
        %v796 = vmul.f32 %v788, %v788
        %v797 = vmul.f32 %v789, %v789
        %v798 = vmul.f32 %v790, %v790
        %v799 = vmin.f32 %v775, %v791
        %v800 = vmin.f32 %v776, %v792
        %v801 = vmin.f32 %v777, %v793
        %v802 = vmin.f32 %v778, %v794
        %v803 = vmin.f32 %v779, %v795
        %v804 = vmin.f32 %v780, %v796
        %v805 = vmin.f32 %v781, %v797
        %v806 = vmin.f32 %v782, %v798
        %807 = vrot.lane.b32.xlu0 %v711, 127
        %v808 = vpop.permute.xlu0 %807
        %809 = vrot.lane.b32.xlu0 %v712, 127
        %v810 = vpop.permute.xlu0 %809
        %811 = vrot.lane.b32.xlu0 %v713, 127
        %v812 = vpop.permute.xlu0 %811
        %813 = vrot.lane.b32.xlu0 %v714, 127
        %v814 = vpop.permute.xlu0 %813
        %815 = vrot.lane.b32.xlu0 %v715, 127
        %v816 = vpop.permute.xlu0 %815
        %817 = vrot.lane.b32.xlu0 %v716, 127
        %v818 = vpop.permute.xlu0 %817
        %819 = vrot.lane.b32.xlu0 %v717, 127
        %v820 = vpop.permute.xlu0 %819
        %821 = vrot.lane.b32.xlu0 %v718, 127
        %v822 = vpop.permute.xlu0 %821
        %v831 = vsel %vm391, inf, %v808
        %v832 = vsel %vm391, inf, %v810
        %v833 = vsel %vm391, inf, %v812
        %v834 = vsel %vm391, inf, %v814
        %v835 = vsel %vm391, inf, %v816
        %v836 = vsel %vm391, inf, %v818
        %v837 = vsel %vm391, inf, %v820
        %v838 = vsel %vm391, inf, %v822
        %v839 = vsub.f32 %v831, %v206
        %v840 = vsub.f32 %v832, %v207
        %v841 = vsub.f32 %v833, %v208
        %v842 = vsub.f32 %v834, %v209
        %v843 = vsub.f32 %v835, %v210
        %v844 = vsub.f32 %v836, %v211
        %v845 = vsub.f32 %v837, %v212
        %v846 = vsub.f32 %v838, %v213
        %v847 = vmul.f32 %v839, %v839
        %v848 = vmul.f32 %v840, %v840
        %v849 = vmul.f32 %v841, %v841
        %v850 = vmul.f32 %v842, %v842
        %v851 = vmul.f32 %v843, %v843
        %v852 = vmul.f32 %v844, %v844
        %v853 = vmul.f32 %v845, %v845
        %v854 = vmul.f32 %v846, %v846
        %v855 = vmin.f32 %v799, %v847
        %v856 = vmin.f32 %v800, %v848
        %v857 = vmin.f32 %v801, %v849
        %v858 = vmin.f32 %v802, %v850
        %v859 = vmin.f32 %v803, %v851
        %v860 = vmin.f32 %v804, %v852
        %v861 = vmin.f32 %v805, %v853
        %v862 = vmin.f32 %v806, %v854
        %vm863 = vcmp.lt.f32.partialorder %v855, inf
        %vm864 = vcmp.lt.f32.partialorder %v856, inf
        %vm865 = vcmp.lt.f32.partialorder %v857, inf
        %vm866 = vcmp.lt.f32.partialorder %v858, inf
        %vm867 = vcmp.lt.f32.partialorder %v859, inf
        %vm868 = vcmp.lt.f32.partialorder %v860, inf
        %vm869 = vcmp.lt.f32.partialorder %v861, inf
        %vm870 = vcmp.lt.f32.partialorder %v862, inf
        %v871 = vsel %vm863, %v855, 0.0
        %v872 = vsel %vm864, %v856, 0.0
        %v873 = vsel %vm865, %v857, 0.0
        %v874 = vsel %vm866, %v858, 0.0
        %v875 = vsel %vm867, %v859, 0.0
        %v876 = vsel %vm868, %v860, 0.0
        %v877 = vsel %vm869, %v861, 0.0
        %v878 = vsel %vm870, %v862, 0.0
        %vm879 = vcmask 130048
        %v880 = vsel %vm879, %v871, 0.0
        %v881 = vsel %vm879, %v872, 0.0
        %v882 = vadd.f32 %v880, %v881
        %v883 = vsel %vm879, %v873, 0.0
        %v884 = vadd.f32 %v882, %v883
        %v885 = vsel %vm879, %v874, 0.0
        %v886 = vadd.f32 %v884, %v885
        %v887 = vsel %vm879, %v875, 0.0
        %v888 = vadd.f32 %v886, %v887
        %v889 = vsel %vm879, %v876, 0.0
        %v890 = vadd.f32 %v888, %v889
        %v891 = vsel %vm879, %v877, 0.0
        %v892 = vadd.f32 %v890, %v891
        %v893 = vsel %vm879, %v878, 0.0
        %v894 = vadd.f32 %v892, %v893
        %895 = vadd.xlane.f32.xlu0 %v894
        %v896 = vpop.xlane.xlu0 %895
        %v897 = vrot.slane %v896, 4
        %v898 = vadd.f32 %v896, %v897
        %v899 = vrot.slane %v898, 2
        %v900 = vadd.f32 %v898, %v899
        %v901 = vrot.slane %v900, 1
        %v902 = vadd.f32 %v900, %v901
        %s903 = vtos %v902
        %v904 = vsel %vm863, 1, 0
        %v905 = vsel %vm864, 1, 0
        %v906 = vsel %vm865, 1, 0
        %v907 = vsel %vm866, 1, 0
        %v908 = vsel %vm867, 1, 0
        %v909 = vsel %vm868, 1, 0
        %v910 = vsel %vm869, 1, 0
        %v911 = vsel %vm870, 1, 0
        %v912 = vcvt.s32.f32 %v904
        %v913 = vcvt.s32.f32 %v905
        %v914 = vcvt.s32.f32 %v906
        %v915 = vcvt.s32.f32 %v907
        %v916 = vcvt.s32.f32 %v908
        %v917 = vcvt.s32.f32 %v909
        %v918 = vcvt.s32.f32 %v910
        %v919 = vcvt.s32.f32 %v911
        %v920 = vsel %vm879, %v912, 0.0
        %v921 = vsel %vm879, %v913, 0.0
        %v922 = vadd.f32 %v920, %v921
        %v923 = vsel %vm879, %v914, 0.0
        %v924 = vadd.f32 %v922, %v923
        %v925 = vsel %vm879, %v915, 0.0
        %v926 = vadd.f32 %v924, %v925
        %v927 = vsel %vm879, %v916, 0.0
        %v928 = vadd.f32 %v926, %v927
        %v929 = vsel %vm879, %v917, 0.0
        %v930 = vadd.f32 %v928, %v929
        %v931 = vsel %vm879, %v918, 0.0
        %v932 = vadd.f32 %v930, %v931
        %v933 = vsel %vm879, %v919, 0.0
        %v934 = vadd.f32 %v932, %v933
        %935 = vadd.xlane.f32.xlu0 %v934
        %v936 = vpop.xlane.xlu0 %935
        %v937 = vrot.slane %v936, 4
        %v938 = vadd.f32 %v936, %v937
        %v939 = vrot.slane %v938, 2
        %v940 = vadd.f32 %v938, %v939
        %v941 = vrot.slane %v940, 1
        %v942 = vadd.f32 %v940, %v941
        %s943 = vtos %v942
        %vm944 = vcmp.eq.s32.totalorder %v226, 0
        %vm945 = vcmp.eq.s32.totalorder %v226, 1
        %v946 = vstv %s943
        %v947 = vsel %vm945, %v946, 0.0
        %v948 = vstv %s903
        %v949 = vsel %vm944, %v948, %v947
        %950 = vst [vmem:[%s203] sm:$0xff] %v949
        %s951 = sand.u32 %s82, 1
        %s952 = scalar_lea.sflag [#allocation4], %s951
        %s953 = sand.u32 %s82, 1
        %s954 = smul.addr %s953, 8
        %s955 = scalar_lea.vmem [#allocation7], %s954
        // Predicated region
        $region37: #{tpu_custom_call.1} parent=27 // pred_check
          %p956 = pneg %p92
        $region38: #{tpu_custom_call.1} parent=27 // pred_check_branch
          %958 = sbr.rel (%p956) target = $region40
        $region39: #{tpu_custom_call.1} parent=27 // pred_region
          %s960 = ssub.s32 128, 128
          %961 = vsyncadd %s952, %s960
          %s962 = smul.addr %s22, 128
          %s963 = scalar_lea.hbm %s2, %s962
          %s965 = sshll.u32 %s955, 4
          %s966 = int_to_ptr.vmem [resolvable:$true] %s965
          %968 = dma.vmem_to_hbm [thread:$0]  %s966, 128, %s963, %s952
        $region40: #{tpu_custom_call.1} parent=27 // pred_fallthru
          _
      $region28: #{tpu_custom_call.1} parent=5 // pred_fallthru
        _
      %p969 = scmp.le.s32.totalorder 2, %s17
      // Predicated region
      $region41: #{tpu_custom_call.1} parent=5 // pred_check
        %p970 = pneg %p969
      $region42: #{tpu_custom_call.1} parent=5 // pred_check_branch
        %972 = sbr.rel (%p970) target = $region44
      $region43: #{tpu_custom_call.1} parent=5 // pred_region
        %s973 = ssub.s32 %s17, 2
        // Predicated region
        $region45: #{tpu_custom_call.1} parent=43 // pred_check
          %p974 = pneg %p98
        $region46: #{tpu_custom_call.1} parent=43 // pred_check_branch
          %976 = sbr.rel (%p974) target = $region48
        $region47: #{tpu_custom_call.1} parent=43 // pred_region
          %s977 = sand.u32 %s83, 1
          %s978 = scalar_lea.sflag [#allocation4], %s977
          %s979 = sand.u32 %s83, 1
          %s980 = smul.addr %s979, 8
          %s981 = scalar_lea.vmem [#allocation7], %s980
          %982 = dma.done %s978, 128
        $region48: #{tpu_custom_call.1} parent=43 // pred_fallthru
          _
      $region44: #{tpu_custom_call.1} parent=5 // pred_fallthru
        _
    $region6: #{tpu_custom_call.1} parent=1 // loop_footer
      %s21 = sadd.s32 1, %s17
    $region7: #{tpu_custom_call.1} parent=1 // loop_footer_branch
      %16 = sbr.rel target = $region3
    $region8: #{tpu_custom_call.1} parent=1 // loop_exit
      _
    %983 = vsyncpa [#allocation3], 1
    %s984 = scalar_lea.sflag [#allocation3], 1
    %985 = vsyncpa %s984, 1
    %986 = vsyncpa [#allocation6], 1
    %s987 = scalar_lea.sflag [#allocation6], 1
    %988 = vsyncpa %s987, 1
    %989 = vsyncpa [#allocation4], 1
    %s990 = scalar_lea.sflag [#allocation4], 1
    %991 = vsyncpa %s990, 1

</llo_original>
